<compile_context>
chip_gen: v6e
topology: v6e:2x2x1
jax: 0.10.0
libtpu: 0.0.40
codegen_flags: <defaults>
</compile_context>

<pallas_src>
import functools

import jax
import jax.numpy as jnp
from jax.experimental import pallas as pl
from jax.experimental.pallas import tpu as pltpu

_LANES = 128
_SUBLANES = 8


# --------------------------------------------------------------------------- #
# Kernel
# --------------------------------------------------------------------------- #
def _bce_ls_kernel(logits_ref, targets_ref, out_ref, *,
                   smoothing, num_classes, block_rows, num_inner, num_tiles,
                   tail_rem):
    """One (block_rows, 128) tile -> accumulate an (8, 128) partial sum."""
    s = pl.program_id(0)          # parallel split (megacore / v7x dual-TC)
    k = pl.program_id(1)          # reduction axis within the split
    tile_idx = s * num_inner + k  # global tile index (only the last is ragged)

    @pl.when(k == 0)
    def _init():
        out_ref[...] = jnp.zeros_like(out_ref)

    x = logits_ref[...].astype(jnp.float32)
    t = targets_ref[...].astype(jnp.float32)

    # Label smoothing: t' = t * (1 - s) + s / num_classes
    t = t * (1.0 - smoothing) + (smoothing / num_classes)

    # Numerically stable BCE-with-logits (== F.binary_cross_entropy_with_logits):
    #   loss = max(x, 0) - x * t + log(1 + exp(-|x|))
    per_elem = jnp.maximum(x, 0.0) - x * t + jnp.log1p(jnp.exp(-jnp.abs(x)))

    def _partial(v):
        # (block_rows,128) -> (block_rows/8, 8, 128) -> sum over vreg groups.
        # Pure VPU adds into the VMEM-resident (8,128) accumulator; the cheap
        # cross-lane reduce happens once in the wrapper.
        return v.reshape(block_rows // _SUBLANES, _SUBLANES, _LANES).sum(axis=0)

    if tail_rem is None:
        # Problem size is an exact multiple of the block: never any padding.
        out_ref[...] += _partial(per_elem)
    else:
        is_tail = tile_idx == (num_tiles - 1)

        # Fast path: bulk tiles are fully valid -> no iota/compare/select work.
        @pl.when(jnp.logical_not(is_tail))
        def _bulk():
            out_ref[...] += _partial(per_elem)

        # Only the final tile can contain padded zeros / ragged garbage rows.
        # tail_rem is a *static* Python int (< block_rows*128), and the iota is
        # tile-relative, so no int32 overflow regardless of total n_elems.
        @pl.when(is_tail)
        def _tail():
            row = jax.lax.broadcasted_iota(jnp.int32, (block_rows, 1), 0)
            lane = jax.lax.broadcasted_iota(jnp.int32, (1, _LANES), 1)
            local = row * _LANES + lane
            out_ref[...] += _partial(jnp.where(local < tail_rem, per_elem, 0.0))


# --------------------------------------------------------------------------- #
# Reference (also the tiny-input fallback path)
# --------------------------------------------------------------------------- #
def _reference_loss(logits, targets, smoothing=0.1, num_classes=14):
    x = logits.astype(jnp.float32)
    t = targets.astype(jnp.float32) * (1.0 - smoothing) + smoothing / num_classes
    loss = jnp.maximum(x, 0.0) - x * t + jnp.log1p(jnp.exp(-jnp.abs(x)))
    return jnp.mean(loss)


# --------------------------------------------------------------------------- #
# Chip-aware defaults
# --------------------------------------------------------------------------- #
def _device_kind():
    try:
        return jax.devices()[0].device_kind.lower()
    except Exception:  # pragma: no cover - defensive
        return ""


def _num_tensorcores():
    kind = _device_kind()
    # v7x: 2 TensorCores/chip; v4/v5p megacore also shard "parallel" grid axes
    # across 2 cores.  v5e/v6e are single-core -> extra splits are pure waste.
    if any(tag in kind for tag in ("v7", "v5p", "v4")):
        return 2
    return 1


def _default_block_rows(itemsize):
    kind = _device_kind()
    base = 4096 if itemsize <= 2 else 2048   # equalize bytes/step for bf16 vs f32
    if "v7" in kind:
        base *= 2        # ~3.2 TB/s HBM: need ~2x bytes/step to amortize step cost
    elif "v5e" in kind or "v5 lite" in kind:
        base //= 2       # ~0.82 TB/s HBM: 1-2 MiB/step already ~85%+ of roofline
    return base


def _round_up(x, m):
    return -(-x // m) * m


# --------------------------------------------------------------------------- #
# Wrapper
# --------------------------------------------------------------------------- #
def label_smoothing_bce_with_logits_loss(
        logits, targets, smoothing=0.1, num_classes=14, *,
        block_rows=None, num_splits=None, use_pallas=None):
    """Forward pass of LabelSmoothingBCEWithLogitsLoss (mean reduction).

    Inputs may be bf16 end-to-end (they are cast to f32 inside the kernel);
    keeping them bf16 halves the streamed HBM bytes of this bandwidth-bound
    reduction.
    """
    assert 0.0 <= smoothing < 1.0
    assert logits.shape == targets.shape

    n_elems = 1
    for d in logits.shape:
        n_elems *= int(d)

    # Tiny problems: pallas_call launch + DMA fixed overhead dominates.
    if use_pallas is None:
        use_pallas = n_elems >= (1 << 14)
    if not use_pallas or n_elems == 0:
        return _reference_loss(logits, targets, smoothing, num_classes)

    itemsize = jnp.dtype(logits.dtype).itemsize

    # ---- lane-dense (rows, 128) layout -------------------------------------
    flat_logits = logits.reshape(-1)     # free: row-major bitcast
    flat_targets = targets.reshape(-1)

    rem = n_elems % _LANES
    if rem:
        # TODO(synk): this jnp.pad is a full HBM read+write of both inputs;
        # provide inputs whose element count is a multiple of 128 (or already
        # shaped (rows, 128)) upstream to avoid it.  Pad to an 8x128 multiple
        # since we are copying anyway (keeps the row count sublane-aligned).
        padded = _round_up(n_elems, _SUBLANES * _LANES)
        flat_logits = jnp.pad(flat_logits, (0, padded - n_elems))
        flat_targets = jnp.pad(flat_targets, (0, padded - n_elems))
        rows = padded // _LANES
    else:
        rows = n_elems // _LANES         # no pad, no copy

    logits2d = flat_logits.reshape(rows, _LANES)
    targets2d = flat_targets.reshape(rows, _LANES)

    # ---- block / grid selection --------------------------------------------
    if block_rows is None:
        block_rows = _default_block_rows(itemsize)
    block_rows = max(_SUBLANES, (int(block_rows) // _SUBLANES) * _SUBLANES)
    block_rows = min(block_rows, _round_up(rows, _SUBLANES))   # clamp to problem

    tiles_needed = -(-rows // block_rows)

    if num_splits is None:
        num_splits = 2 if (_num_tensorcores() >= 2 and tiles_needed >= 2) else 1
    num_splits = max(1, min(int(num_splits), tiles_needed))
    while tiles_needed % num_splits:      # balanced splits only -> no dead tiles
        num_splits -= 1
    num_inner = tiles_needed // num_splits

    block_elems = block_rows * _LANES
    tail_rem = n_elems - (tiles_needed - 1) * block_elems   # static, <= block_elems
    needs_tail_mask = tail_rem < block_elems

    kernel = functools.partial(
        _bce_ls_kernel,
        smoothing=float(smoothing),
        num_classes=int(num_classes),
        block_rows=block_rows,
        num_inner=num_inner,
        num_tiles=tiles_needed,
        tail_rem=tail_rem if needs_tail_mask else None,
    )

    in_bytes = (logits2d.size * logits2d.dtype.itemsize
                + targets2d.size * targets2d.dtype.itemsize)
    out_bytes = num_splits * _SUBLANES * _LANES * 4
    cost = pl.CostEstimate(
        flops=5 * n_elems,
        transcendentals=2 * n_elems,
        bytes_accessed=in_bytes + out_bytes,
    )

    # NOTE: on v7x one may additionally sweep pipeline_mode=pl.Buffered(3) on
    # the two input BlockSpecs; at these block sizes VMEM allows it easily.
    partials = pl.pallas_call(
        kernel,
        out_shape=jax.ShapeDtypeStruct((num_splits * _SUBLANES, _LANES),
                                       jnp.float32),
        grid_spec=pltpu.PrefetchScalarGridSpec(
            num_scalar_prefetch=0,
            grid=(num_splits, num_inner),
            in_specs=[
                pl.BlockSpec((block_rows, _LANES),
                             lambda s, k: (s * num_inner + k, 0)),
                pl.BlockSpec((block_rows, _LANES),
                             lambda s, k: (s * num_inner + k, 0)),
            ],
            out_specs=pl.BlockSpec((_SUBLANES, _LANES), lambda s, k: (s, 0)),
        ),
        compiler_params=pltpu.CompilerParams(
            dimension_semantics=("parallel", "arbitrary"),
        ),
        cost_estimate=cost,
    )(logits2d, targets2d)

    # Final tiny cross-lane reduce + mean (num_splits * 8 * 128 elems) in JAX.
    return jnp.sum(partials) / n_elems


# --------------------------------------------------------------------------- #
# Self-test
# --------------------------------------------------------------------------- #
if __name__ == "__main__":
    key = jax.random.PRNGKey(0)
    k1, k2, k3, k4, k5, k6, k7, k8 = jax.random.split(key, 8)

    num_classes = 14

    # Case 1: module-sized tiny input (8, 14), f32.  Forces the Pallas path to
    # exercise the sub-128 pad + tail mask with a single ragged tile.
    logits_a = jax.random.normal(k1, (8, num_classes), dtype=jnp.float32)
    targets_a = (jax.random.uniform(k2, (8, num_classes)) > 0.5).astype(jnp.float32)
    loss_a = label_smoothing_bce_with_logits_loss(
        logits_a, targets_a, smoothing=0.1, num_classes=num_classes,
        block_rows=8, num_splits=2, use_pallas=True)
    loss_a = jax.block_until_ready(loss_a)
    ref_a = _reference_loss(logits_a, targets_a, 0.1, num_classes)
    assert jnp.allclose(loss_a, ref_a, rtol=1e-5, atol=1e-5), (loss_a, ref_a)

    # Case 2: (256, 14) bf16 -> multi-tile grid with 2 balanced splits, ragged
    # final tile, in-kernel f32 cast.
    logits_b = jax.random.normal(k3, (256, num_classes), dtype=jnp.bfloat16)
    targets_b = (jax.random.uniform(k4, (256, num_classes)) > 0.5).astype(jnp.bfloat16)
    loss_b = label_smoothing_bce_with_logits_loss(
        logits_b, targets_b, smoothing=0.1, num_classes=num_classes,
        block_rows=8, num_splits=2, use_pallas=True)
    loss_b = jax.block_until_ready(loss_b)
    ref_b = _reference_loss(logits_b, targets_b, 0.1, num_classes)
    assert jnp.allclose(loss_b, ref_b, rtol=1e-5, atol=1e-5), (loss_b, ref_b)

    # Case 3: (512, 16) f32 -> element count is an exact multiple of the block,
    # so the zero-pad / tail-mask machinery is completely skipped (fast path).
    logits_c = jax.random.normal(k5, (512, 16), dtype=jnp.float32)
    targets_c = (jax.random.uniform(k6, (512, 16)) > 0.5).astype(jnp.float32)
    loss_c = label_smoothing_bce_with_logits_loss(
        logits_c, targets_c, smoothing=0.1, num_classes=num_classes,
        block_rows=16, num_splits=2, use_pallas=True)
    loss_c = jax.block_until_ready(loss_c)
    ref_c = _reference_loss(logits_c, targets_c, 0.1, num_classes)
    assert jnp.allclose(loss_c, ref_c, rtol=1e-5, atol=1e-5), (loss_c, ref_c)

    # Case 4: (2048, 14) f32 with all defaults -> auto chip-aware block size,
    # auto split count, no pad copy needed (2048*14 = 28672 = 224 * 128).
    logits_d = jax.random.normal(k7, (2048, num_classes), dtype=jnp.float32)
    targets_d = (jax.random.uniform(k8, (2048, num_classes)) > 0.5).astype(jnp.float32)
    loss_d = label_smoothing_bce_with_logits_loss(
        logits_d, targets_d, smoothing=0.1, num_classes=num_classes)
    loss_d = jax.block_until_ready(loss_d)
    ref_d = _reference_loss(logits_d, targets_d, 0.1, num_classes)
    assert jnp.allclose(loss_d, ref_d, rtol=1e-5, atol=1e-5), (loss_d, ref_d)

    # Case 5: auto-dispatch on a tiny input falls back to plain XLA.
    loss_e = label_smoothing_bce_with_logits_loss(
        logits_a, targets_a, smoothing=0.1, num_classes=num_classes)
    loss_e = jax.block_until_ready(loss_e)
    assert jnp.allclose(loss_e, ref_a, rtol=1e-5, atol=1e-5), (loss_e, ref_a)

    print("KERNEL_OK")
</pallas_src>

<mosaic_0001>
module attributes {stable_mosaic.version = 11 : i64} {
  func.func @_bce_ls_kernel(%arg0: i32, %arg1: i32, %arg2: memref<8x128xf32, #tpu.memory_space<vmem>>, %arg3: memref<8x128xf32, #tpu.memory_space<vmem>>, %arg4: memref<8x128xf32, #tpu.memory_space<vmem>>) attributes {dimension_semantics = [#tpu.dimension_semantics<parallel>, #tpu.dimension_semantics<arbitrary>], iteration_bounds = array<i64: 1, 1>, scalar_prefetch = 0 : i64, scratch_operands = 0 : i64, tpu.core_type = #tpu.core_type<tc>, window_params = [{transform_indices = @transform_0, window_bounds = array<i64: 8, 128>}, {transform_indices = @transform_1, window_bounds = array<i64: 8, 128>}, {transform_indices = @transform_2, window_bounds = array<i64: 8, 128>}]} {
    %c1_i32 = arith.constant 1 : i32
    %0 = arith.muli %arg0, %c1_i32 : i32
    %1 = arith.addi %0, %arg1 : i32
    %c0_i32 = arith.constant 0 : i32
    %2 = arith.cmpi eq, %arg1, %c0_i32 : i32
    %3 = arith.extui %2 : i1 to i32
    %c0_i32_0 = arith.constant 0 : i32
    %4 = arith.cmpi ne, %3, %c0_i32_0 : i32
    scf.if %4 {
      %cst_10 = arith.constant 0.000000e+00 : f32
      %27 = vector.broadcast %cst_10 : f32 to vector<8x128xf32>
      %c0_11 = arith.constant 0 : index
      %c0_12 = arith.constant 0 : index
      %28 = vector.load %arg4[%c0_11, %c0_12] : memref<8x128xf32, #tpu.memory_space<vmem>>, vector<8x128xf32>
      tpu.vector_store %arg4[%c0_11, %c0_12], %27 {strides = array<i32>} : memref<8x128xf32, #tpu.memory_space<vmem>>, vector<8x128xf32>,
    } else {
    }
    %c0 = arith.constant 0 : index
    %c0_1 = arith.constant 0 : index
    %5 = vector.load %arg2[%c0, %c0_1] : memref<8x128xf32, #tpu.memory_space<vmem>>, vector<8x128xf32>
    %c0_2 = arith.constant 0 : index
    %c0_3 = arith.constant 0 : index
    %6 = vector.load %arg3[%c0_2, %c0_3] : memref<8x128xf32, #tpu.memory_space<vmem>>, vector<8x128xf32>
    %cst = arith.constant 0.899999976 : f32
    %7 = vector.broadcast %cst : f32 to vector<8x128xf32>
    %8 = arith.mulf %6, %7 : vector<8x128xf32>
    %cst_4 = arith.constant 0.00714285718 : f32
    %9 = vector.broadcast %cst_4 : f32 to vector<8x128xf32>
    %10 = arith.addf %8, %9 : vector<8x128xf32>
    %cst_5 = arith.constant 0.000000e+00 : f32
    %11 = vector.broadcast %cst_5 : f32 to vector<8x128xf32>
    %12 = arith.maximumf %5, %11 : vector<8x128xf32>
    %13 = arith.mulf %5, %10 : vector<8x128xf32>
    %14 = arith.subf %12, %13 : vector<8x128xf32>
    %15 = math.absf %5 : vector<8x128xf32>
    %cst_6 = arith.constant 0.000000e+00 : f32
    %16 = vector.broadcast %cst_6 : f32 to vector<8x128xf32>
    %17 = arith.subf %16, %15 : vector<8x128xf32>
    %18 = math.exp %17 : vector<8x128xf32>
    %19 = math.log1p %18 : vector<8x128xf32>
    %20 = arith.addf %14, %19 : vector<8x128xf32>
    %c0_i32_7 = arith.constant 0 : i32
    %21 = arith.cmpi eq, %1, %c0_i32_7 : i32
    %true = arith.constant true
    %22 = arith.xori %21, %true : i1
    %23 = arith.extui %22 : i1 to i32
    %c0_i32_8 = arith.constant 0 : i32
    %24 = arith.cmpi ne, %23, %c0_i32_8 : i32
    scf.if %24 {
      %c0_10 = arith.constant 0 : index
      %c0_11 = arith.constant 0 : index
      %27 = vector.load %arg4[%c0_10, %c0_11] : memref<8x128xf32, #tpu.memory_space<vmem>>, vector<8x128xf32>
      %28 = vector.shape_cast %20 : vector<8x128xf32> to vector<1x8x128xf32>
      %cst_12 = arith.constant dense<0.000000e+00> : vector<8x128xf32>
      %29 = vector.multi_reduction <add>, %28, %cst_12 [0] : vector<1x8x128xf32> to vector<8x128xf32>
      %30 = arith.addf %27, %29 : vector<8x128xf32>
      %c0_13 = arith.constant 0 : index
      %c0_14 = arith.constant 0 : index
      %31 = vector.load %arg4[%c0_13, %c0_14] : memref<8x128xf32, #tpu.memory_space<vmem>>, vector<8x128xf32>
      tpu.vector_store %arg4[%c0_13, %c0_14], %30 {strides = array<i32>} : memref<8x128xf32, #tpu.memory_space<vmem>>, vector<8x128xf32>,
    } else {
    }
    %25 = arith.extui %21 : i1 to i32
    %c0_i32_9 = arith.constant 0 : i32
    %26 = arith.cmpi ne, %25, %c0_i32_9 : i32
    scf.if %26 {
      %27 = tpu.iota {dimensions = array<i32: 0>} : vector<8x1xi32>
      %28 = tpu.iota {dimensions = array<i32: 1>} : vector<1x128xi32>
      %c128_i32 = arith.constant 128 : i32
      %29 = vector.broadcast %c128_i32 : i32 to vector<8x1xi32>
      %30 = arith.muli %27, %29 : vector<8x1xi32>
      %31 = vector.broadcast %30 : vector<8x1xi32> to vector<8x128xi32>
      %32 = vector.broadcast %28 : vector<1x128xi32> to vector<8x128xi32>
      %33 = arith.addi %31, %32 : vector<8x128xi32>
      %c0_10 = arith.constant 0 : index
      %c0_11 = arith.constant 0 : index
      %34 = vector.load %arg4[%c0_10, %c0_11] : memref<8x128xf32, #tpu.memory_space<vmem>>, vector<8x128xf32>
      %c112_i32 = arith.constant 112 : i32
      %35 = vector.broadcast %c112_i32 : i32 to vector<8x128xi32>
      %36 = arith.cmpi slt, %33, %35 : vector<8x128xi32>
      %cst_12 = arith.constant 0.000000e+00 : f32
      %37 = vector.broadcast %cst_12 : f32 to vector<8x128xf32>
      %38 = arith.select %36, %20, %37 : vector<8x128xi1>, vector<8x128xf32>
      %39 = vector.shape_cast %38 : vector<8x128xf32> to vector<1x8x128xf32>
      %cst_13 = arith.constant dense<0.000000e+00> : vector<8x128xf32>
      %40 = vector.multi_reduction <add>, %39, %cst_13 [0] : vector<1x8x128xf32> to vector<8x128xf32>
      %41 = arith.addf %34, %40 : vector<8x128xf32>
      %c0_14 = arith.constant 0 : index
      %c0_15 = arith.constant 0 : index
      %42 = vector.load %arg4[%c0_14, %c0_15] : memref<8x128xf32, #tpu.memory_space<vmem>>, vector<8x128xf32>
      tpu.vector_store %arg4[%c0_14, %c0_15], %41 {strides = array<i32>} : memref<8x128xf32, #tpu.memory_space<vmem>>, vector<8x128xf32>,
    } else {
    }
    return
  }
  func.func @transform_0(%arg0: i32, %arg1: i32) -> (i32, i32) {
    %c1_i32 = arith.constant 1 : i32
    %0 = arith.muli %arg0, %c1_i32 : i32
    %1 = arith.addi %0, %arg1 : i32
    %c0_i32 = arith.constant 0 : i32
    %c0_i32_0 = arith.constant 0 : i32
    return %1, %c0_i32 : i32, i32
  }
  func.func @transform_1(%arg0: i32, %arg1: i32) -> (i32, i32) {
    %c1_i32 = arith.constant 1 : i32
    %0 = arith.muli %arg0, %c1_i32 : i32
    %1 = arith.addi %0, %arg1 : i32
    %c0_i32 = arith.constant 0 : i32
    %c0_i32_0 = arith.constant 0 : i32
    return %1, %c0_i32 : i32, i32
  }
  func.func @transform_2(%arg0: i32, %arg1: i32) -> (i32, i32) {
    %c0_i32 = arith.constant 0 : i32
    %c0_i32_0 = arith.constant 0 : i32
    return %arg0, %c0_i32 : i32, i32
  }
}

</mosaic_0001>

<llo_original>
// kernel: tpu_custom_call.1
$region0: #{tpu_custom_call.1}
  #allocation0 [shape = 'u32[]', space=smem, size = 0x4, offset = 0x4, fixed_abs, tag = 'smem constant byte address 0x4 - core index']
  #allocation1 [shape = 'u32[144,128]{1,0:T(1,128)}', space=vmem, size = 0x12000, scoped, tag = 'internal scratch']
  %s0 = inlined_call_operand.hbm [shape: f32[8,128], index: 0, kind: input, shape index: {}]
  %s1 = inlined_call_operand.hbm [shape: f32[8,128], index: 1, kind: input, shape index: {}]
  %s2 = inlined_call_operand.hbm [shape: f32[8,128], index: 2, kind: output, shape index: {}]
  %s3 = sld [smem:[#allocation0]]
  $region38: #{tpu_custom_call.1} parent=0
    _
  %s5 = ssub.s32 1, %s3
  %s6 = scalar_select 0, %s5, %s3
  $region1: #{tpu_custom_call.1} parent=0
    #allocation2 [shape = 'u8[4096]{0}', space=vmem, size = 0x1000, scoped, tag = 'input window, operand 0, single buffered']
    #allocation3 [shape = 's32[1]{0}', space=sflag, size = 0x4, scoped, tag = 'scoped memory for tpu_custom_call.1']
    #allocation4 [shape = 's32[1]{0}', space=sflag, size = 0x4, scoped, tag = 'scoped memory for tpu_custom_call.1']
    #allocation5 [shape = 'u8[4096]{0}', space=vmem, size = 0x1000, scoped, tag = 'input window, operand 1, single buffered']
    #allocation6 [shape = 's32[1]{0}', space=sflag, size = 0x4, scoped, tag = 'scoped memory for tpu_custom_call.1']
    #allocation7 [shape = 'u8[4096]{0}', space=vmem, size = 0x1000, scoped, tag = 'output window, operand 0, single buffered']
    %7 = vsyncpa [#allocation3], 0
    %8 = vsyncpa [#allocation6], 0
    %9 = vsyncpa [#allocation4], 0
    // Predicated region
    $region2: #{tpu_custom_call.1} parent=1 // pred_check
      _
    $region3: #{tpu_custom_call.1} parent=1 // pred_check_branch
      %11 = sbr.rel (0) target = $region5
    $region4: #{tpu_custom_call.1} parent=1 // pred_region
      %s12 = sadd.s32 0, 0
      %s14 = ssub.s32 128, 128
      %15 = vsyncadd [#allocation3], %s14
      %s16 = smul.addr %s12, 128
      %s17 = scalar_lea.hbm %s0, %s16
      %s19 = sshll.u32 [#allocation2], 4
      %s20 = int_to_ptr.vmem [resolvable:$true] %s19
      %22 = dma.hbm_to_vmem [thread:$0]  %s17, 128, %s20, [#allocation3]
    $region5: #{tpu_custom_call.1} parent=1 // pred_fallthru
      _
    // Predicated region
    $region6: #{tpu_custom_call.1} parent=1 // pred_check
      _
    $region7: #{tpu_custom_call.1} parent=1 // pred_check_branch
      %24 = sbr.rel (0) target = $region9
    $region8: #{tpu_custom_call.1} parent=1 // pred_region
      %s25 = sadd.s32 0, 0
      %s27 = ssub.s32 128, 128
      %28 = vsyncadd [#allocation6], %s27
      %s29 = smul.addr %s25, 128
      %s30 = scalar_lea.hbm %s1, %s29
      %s32 = sshll.u32 [#allocation5], 4
      %s33 = int_to_ptr.vmem [resolvable:$true] %s32
      %35 = dma.hbm_to_vmem [thread:$0]  %s30, 128, %s33, [#allocation6]
    $region9: #{tpu_custom_call.1} parent=1 // pred_fallthru
      _
    // Predicated region
    $region10: #{tpu_custom_call.1} parent=1 // pred_check
      _
    $region11: #{tpu_custom_call.1} parent=1 // pred_check_branch
      %37 = sbr.rel (0) target = $region13
    $region12: #{tpu_custom_call.1} parent=1 // pred_region
      %38 = dma.done [#allocation3], 128
    $region13: #{tpu_custom_call.1} parent=1 // pred_fallthru
      _
    // Predicated region
    $region14: #{tpu_custom_call.1} parent=1 // pred_check
      _
    $region15: #{tpu_custom_call.1} parent=1 // pred_check_branch
      %40 = sbr.rel (0) target = $region17
    $region16: #{tpu_custom_call.1} parent=1 // pred_region
      %41 = dma.done [#allocation6], 128
    $region17: #{tpu_custom_call.1} parent=1 // pred_fallthru
      _
    %s42 = sadd.s32 0, 0
    %s43 = sadd.s32 0, 0
    %s44 = sadd.s32 0, 0
    %p45 = scmp.eq.s32.totalorder 0, 0
    // Predicated region
    $region18: #{tpu_custom_call.1} parent=1 // pred_check
      %p46 = pneg %p45
    $region19: #{tpu_custom_call.1} parent=1 // pred_check_branch
      %48 = sbr.rel (%p46) target = $region21
    $region20: #{tpu_custom_call.1} parent=1 // pred_region
      %49 = vst [vmem:[#allocation7] sm:$0xff] 0.0
    $region21: #{tpu_custom_call.1} parent=1 // pred_fallthru
      _
    %v50 = vld [vmem:[#allocation2] sm:$0xff]
    %v51 = vld [vmem:[#allocation5] sm:$0xff]
    %v52 = vmul.f32 %v51, 0.9
    %v53 = vadd.f32 %v52, 0.007142857
    %v54 = vmax.f32 %v50, 0.0
    %v55 = vmul.f32 %v50, %v53
    %v56 = vsub.f32 %v54, %v55
    %v57 = vand.u32 2147483647, %v50
    %v58 = vsub.f32 0.0, %v57
    %v59 = vmul.f32 %v58, 1.442695
    %v60 = vpow.pop %v59
    %v61 = vadd.f32 %v60, 1.0
    %v62 = vlog2.pop %v61
    %v63 = vmul.f32 %v62, 0.6931472
    %v64 = vmul.f32 -0.5, %v60
    %v65 = vadd.f32 %v64, 1.0
    %v66 = vmul.f32 %v65, %v60
    %v67 = vand.u32 2147483647, %v60
    %vm68 = vcmp.lt.f32.partialorder %v67, 0.0004427343
    %v69 = vsel %vm68, %v66, %v63
    %v70 = vadd.f32 %v56, %v69
    %p71 = scmp.eq.s32.totalorder %s44, 0
    %p72 = scmp.ne.s32.totalorder %s44, 0
    // Predicated region
    $region22: #{tpu_custom_call.1} parent=1 // pred_check
      %p73 = pneg %p72
    $region23: #{tpu_custom_call.1} parent=1 // pred_check_branch
      %75 = sbr.rel (%p73) target = $region25
    $region24: #{tpu_custom_call.1} parent=1 // pred_region
      %v76 = vld [vmem:[#allocation7] sm:$0xff]
      %v77 = vadd.f32 %v70, 0.0
      %v78 = vadd.f32 %v76, %v77
      %79 = vst [vmem:[#allocation7] sm:$0xff] %v78
    $region25: #{tpu_custom_call.1} parent=1 // pred_fallthru
      _
    // Predicated region
    $region26: #{tpu_custom_call.1} parent=1 // pred_check
      %p80 = pneg %p71
    $region27: #{tpu_custom_call.1} parent=1 // pred_check_branch
      %82 = sbr.rel (%p80) target = $region29
    $region28: #{tpu_custom_call.1} parent=1 // pred_region
      %v83 = vlaneseq
      %v84 = vshrl.u32 %v83, 7
      %v85 = vlaneseq
      %v86 = vand.u32 %v85, 127
      %v87 = vmul.u32 %v84, 128
      %v88 = vadd.s32 %v87, %v86
      %v89 = vld [vmem:[#allocation7] sm:$0xff]
      %vm90 = vcmp.lt.s32.totalorder %v88, 112
      %v91 = vsel %vm90, %v70, 0.0
      %v92 = vadd.f32 %v91, 0.0
      %v93 = vadd.f32 %v89, %v92
      %94 = vst [vmem:[#allocation7] sm:$0xff] %v93
    $region29: #{tpu_custom_call.1} parent=1 // pred_fallthru
      _
    // Predicated region
    $region30: #{tpu_custom_call.1} parent=1 // pred_check
      _
    $region31: #{tpu_custom_call.1} parent=1 // pred_check_branch
      %96 = sbr.rel (0) target = $region33
    $region32: #{tpu_custom_call.1} parent=1 // pred_region
      %s98 = ssub.s32 128, 128
      %99 = vsyncadd [#allocation4], %s98
      %s101 = sshll.u32 [#allocation7], 4
      %s102 = int_to_ptr.vmem [resolvable:$true] %s101
      %104 = dma.vmem_to_hbm [thread:$0]  %s102, 128, %s2, [#allocation4]
    $region33: #{tpu_custom_call.1} parent=1 // pred_fallthru
      _
    // Predicated region
    $region34: #{tpu_custom_call.1} parent=1 // pred_check
      _
    $region35: #{tpu_custom_call.1} parent=1 // pred_check_branch
      %106 = sbr.rel (0) target = $region37
    $region36: #{tpu_custom_call.1} parent=1 // pred_region
      %107 = dma.done [#allocation4], 128
    $region37: #{tpu_custom_call.1} parent=1 // pred_fallthru
      _
    %108 = vsyncpa [#allocation3], 1
    %109 = vsyncpa [#allocation6], 1
    %110 = vsyncpa [#allocation4], 1

</llo_original>
